<compile_context>
chip_gen: v6e
topology: v6e:2x2x1
jax: 0.10.0
libtpu: 0.0.40
codegen_flags: <defaults>
</compile_context>

<pallas_src>
import functools

import jax
import jax.numpy as jnp
from jax.experimental import pallas as pl
from jax.experimental.pallas import tpu as pltpu

_F = 128                      # padded weight lane width (MXU-native N/K)
_IN = 32                      # padded input lane width  (>= 21, 8-aligned)
_OUT = 8                      # padded output lane width (>= 2)
_W1_OFF = 0 * _F              # rows [  0, 128) : fc1 weight, stored (in, out), zero-padded
_W2_OFF = 1 * _F              # rows [128, 256) : fc2 weight
_W3_OFF = 2 * _F              # rows [256, 384) : fc3 weight
_B_OFF = 3 * _F               # rows [384, 392) : b1, b2, b3 (one row each) + pad
_SLAB_ROWS = 3 * _F + 8       # 392 rows total (multiple of 8)


def _mlp_kernel(x_ref, p_ref, o_ref):
    x = x_ref[...]                                    # (TB, 32), lane-dense input tile
    w1 = p_ref[_W1_OFF:_W1_OFF + _IN, :]              # (32, 128)  rows 21..31 are zero
    w2 = p_ref[_W2_OFF:_W2_OFF + _F, :]               # (128, 128)
    w3 = p_ref[_W3_OFF:_W3_OFF + _F, :]               # (128, 128)
    b = p_ref[_B_OFF:_B_OFF + 8, :]                   # (8, 128): b1, b2, b3, pad

    h1 = jnp.dot(x, w1, preferred_element_type=jnp.float32) + b[0:1, :]
    h1 = jnp.maximum(h1, 0.0)                         # ReLU(fc1)
    h2 = jnp.dot(h1, w2, preferred_element_type=jnp.float32) + b[1:2, :]
    h2 = jnp.maximum(h2, 0.0)                         # ReLU(fc2)
    out = jnp.dot(h2, w3, preferred_element_type=jnp.float32) + b[2:3, :]
    o_ref[...] = out[:, :_OUT].astype(o_ref.dtype)    # fc3; store only 8 useful lanes


def prepare_params(params):
    """One-time packing of PyTorch-convention params into a single padded slab.

    params: {"w1": (21,21), "b1": (21,), "w2": (21,21), "b2": (21,),
             "w3": (2,21),  "b3": (2,)}
    Returns a (392, 128) float32 slab.  Do this ONCE, not per forward call.
    """
    def pad_w(w):                                     # (out, in) -> (128, 128) stored as (in, out)
        wt = jnp.asarray(w, jnp.float32).T
        return jnp.zeros((_F, _F), jnp.float32).at[: wt.shape[0], : wt.shape[1]].set(wt)

    def pad_b(b):
        b = jnp.asarray(b, jnp.float32)
        return jnp.zeros((_F,), jnp.float32).at[: b.shape[0]].set(b)

    bias_block = jnp.zeros((8, _F), jnp.float32)
    bias_block = bias_block.at[0].set(pad_b(params["b1"]))
    bias_block = bias_block.at[1].set(pad_b(params["b2"]))
    bias_block = bias_block.at[2].set(pad_b(params["b3"]))

    slab = jnp.concatenate(
        [pad_w(params["w1"]), pad_w(params["w2"]), pad_w(params["w3"]), bias_block],
        axis=0,
    )
    assert slab.shape == (_SLAB_ROWS, _F)
    return slab


def _pick_tb(B, block_b):
    """Batch tile size.  Ensures tb % 8 == 0 and, for B >= 16, at least two
    grid steps so the 'parallel' axis can be sharded across v7x's 2 TCs."""
    if B >= 2 * block_b:
        return block_b
    if B >= 16:
        tb = int(pl.cdiv(int(pl.cdiv(B, 2)), 8)) * 8   # ~half the batch, 8-aligned
        return min(tb, block_b)
    return max(8, int(pl.cdiv(B, 8)) * 8)              # very small batch: single tile


def net_forward(x, packed_params, *, block_b=2048, min_pallas_batch=256):
    """x: (B, 21) float32.  packed_params: output of prepare_params.
    Returns (B, 2) float32."""
    B, fin = x.shape
    assert fin <= _IN

    # Tiny-batch fast path: fixed pallas_call cost exceeds the useful compute.
    if B < min_pallas_batch:
        w1 = packed_params[_W1_OFF:_W1_OFF + fin, :fin]
        w2 = packed_params[_W2_OFF:_W2_OFF + fin, :fin]
        w3 = packed_params[_W3_OFF:_W3_OFF + fin, :2]
        b1 = packed_params[_B_OFF + 0, :fin]
        b2 = packed_params[_B_OFF + 1, :fin]
        b3 = packed_params[_B_OFF + 2, :2]
        h1 = jnp.maximum(x.astype(jnp.float32) @ w1 + b1, 0.0)
        h2 = jnp.maximum(h1 @ w2 + b2, 0.0)
        return h2 @ w3 + b3

    tb = _pick_tb(B, block_b)
    b_pad = int(pl.cdiv(B, tb)) * tb

    # One pad handles batch padding (grid tiling) and 21 -> 32 lane padding.
    xp = jnp.pad(x.astype(jnp.float32), ((0, b_pad - B), (0, _IN - fin)))

    grid = (b_pad // tb,)

    # VMEM budget: double-buffered x/out tiles + (double-buffered) resident
    # slab + in-kernel f32 intermediates (h1, h2, full-width out) + headroom.
    xin_bytes = tb * _IN * 4
    out_bytes = tb * _OUT * 4
    slab_bytes = _SLAB_ROWS * _F * 4
    interm_bytes = 4 * tb * _F * 4
    vmem_bytes = 2 * (xin_bytes + out_bytes) + 2 * slab_bytes + interm_bytes + (2 << 20)
    vmem_bytes = min(max(int(vmem_bytes), 8 << 20), 48 << 20)

    out = pl.pallas_call(
        _mlp_kernel,
        out_shape=jax.ShapeDtypeStruct((b_pad, _OUT), jnp.float32),
        grid=grid,
        in_specs=[
            pl.BlockSpec((tb, _IN), lambda i: (i, 0)),          # x: tiled over batch
            pl.BlockSpec((_SLAB_ROWS, _F), lambda i: (0, 0)),   # params: resident
        ],
        out_specs=pl.BlockSpec((tb, _OUT), lambda i: (i, 0)),   # 8-lane output block
        compiler_params=pltpu.CompilerParams(
            dimension_semantics=("parallel",),
            vmem_limit_bytes=int(vmem_bytes),
        ),
    )(xp, packed_params)

    return out[:B, :2]


def init_params(key):
    """Deterministic init matching nn.Linear default shapes (PyTorch convention):
    fc1: (21,21)+(21,), fc2: (21,21)+(21,), fc3: (2,21)+(2,)."""
    ks = jax.random.split(key, 6)

    def uniform(k, shape, fan_in):
        bound = 1.0 / jnp.sqrt(fan_in)
        return jax.random.uniform(k, shape, jnp.float32, -bound, bound)

    return {
        "w1": uniform(ks[0], (21, 21), 21), "b1": uniform(ks[1], (21,), 21),
        "w2": uniform(ks[2], (21, 21), 21), "b2": uniform(ks[3], (21,), 21),
        "w3": uniform(ks[4], (2, 21), 21),  "b3": uniform(ks[5], (2,), 21),
    }


def net_forward_ref(x, p):
    h1 = jnp.maximum(x @ p["w1"].T + p["b1"], 0.0)
    h2 = jnp.maximum(h1 @ p["w2"].T + p["b2"], 0.0)
    return h2 @ p["w3"].T + p["b3"]


if __name__ == "__main__":
    key = jax.random.PRNGKey(0)
    k_params, k_x, k_x2, k_x3 = jax.random.split(key, 4)

    params = init_params(k_params)
    packed = prepare_params(params)      # hoisted, one-time parameter packing

    # 1) Small batch forced through the Pallas kernel (single tile).
    batch = 8
    x = jax.random.normal(k_x, (batch, 21), jnp.float32)
    fwd = jax.jit(functools.partial(net_forward, min_pallas_batch=0))
    out = jax.block_until_ready(fwd(x, packed))
    ref = net_forward_ref(x, params)
    assert out.shape == (batch, 2)
    assert jnp.allclose(out, ref, atol=1e-5, rtol=1e-5), "mismatch vs reference (B=8, pallas)"

    # 2) Multi-tile grid path: non-multiple batch, >=2 parallel steps (v7x path).
    batch2 = 40
    x2 = jax.random.normal(k_x2, (batch2, 21), jnp.float32)
    out2 = jax.block_until_ready(net_forward(x2, packed, min_pallas_batch=0))
    ref2 = net_forward_ref(x2, params)
    assert out2.shape == (batch2, 2)
    assert jnp.allclose(out2, ref2, atol=1e-5, rtol=1e-5), "mismatch vs reference (B=40, pallas)"

    # 3) Default path at a batch above the tiny-batch threshold (still small).
    batch3 = 300
    x3 = jax.random.normal(k_x3, (batch3, 21), jnp.float32)
    out3 = jax.block_until_ready(net_forward(x3, packed))
    ref3 = net_forward_ref(x3, params)
    assert out3.shape == (batch3, 2)
    assert jnp.allclose(out3, ref3, atol=1e-5, rtol=1e-5), "mismatch vs reference (B=300, pallas)"

    # 4) Tiny-batch jnp fast path (default threshold) stays correct too.
    out4 = jax.block_until_ready(net_forward(x, packed))
    assert jnp.allclose(out4, ref, atol=1e-5, rtol=1e-5), "mismatch vs reference (B=8, fast path)"

    print("KERNEL_OK")
</pallas_src>

<mosaic_0001>
module attributes {stable_mosaic.version = 11 : i64} {
  func.func @_mlp_kernel(%arg0: i32, %arg1: memref<8x32xf32, #tpu.memory_space<vmem>>, %arg2: memref<392x128xf32, #tpu.memory_space<vmem>>, %arg3: memref<8x8xf32, #tpu.memory_space<vmem>>) attributes {dimension_semantics = [#tpu.dimension_semantics<parallel>], iteration_bounds = array<i64: 1>, scalar_prefetch = 0 : i64, scratch_operands = 0 : i64, tpu.core_type = #tpu.core_type<tc>, window_params = [{transform_indices = @transform_0, window_bounds = array<i64: 8, 32>}, {pipeline_mode = #tpu.pipeline_mode<synchronous>, transform_indices = @transform_1, window_bounds = array<i64: 392, 128>}, {transform_indices = @transform_2, window_bounds = array<i64: 8, 8>}]} {
    %c0 = arith.constant 0 : index
    %c0_0 = arith.constant 0 : index
    %0 = vector.load %arg1[%c0, %c0_0] : memref<8x32xf32, #tpu.memory_space<vmem>>, vector<8x32xf32>
    %c0_1 = arith.constant 0 : index
    %c0_2 = arith.constant 0 : index
    %1 = vector.load %arg2[%c0_1, %c0_2] : memref<392x128xf32, #tpu.memory_space<vmem>>, vector<32x128xf32>
    %c128 = arith.constant 128 : index
    %c0_3 = arith.constant 0 : index
    %2 = vector.load %arg2[%c128, %c0_3] : memref<392x128xf32, #tpu.memory_space<vmem>>, vector<128x128xf32>
    %c256 = arith.constant 256 : index
    %c0_4 = arith.constant 0 : index
    %3 = vector.load %arg2[%c256, %c0_4] : memref<392x128xf32, #tpu.memory_space<vmem>>, vector<128x128xf32>
    %c384 = arith.constant 384 : index
    %c0_5 = arith.constant 0 : index
    %4 = vector.load %arg2[%c384, %c0_5] : memref<392x128xf32, #tpu.memory_space<vmem>>, vector<8x128xf32>
    %cst = arith.constant dense<0.000000e+00> : vector<8x128xf32>
    %5 = tpu.matmul %0, %1, %cst {dimension_numbers = #tpu.dot_dimension_numbers<[1], [0], [0], [1], [0, 0, 1, 1], [], []>} : vector<8x32xf32>, vector<32x128xf32>, vector<8x128xf32> -> vector<8x128xf32>
    %6 = vector.extract_strided_slice %4 {offsets = [0, 0], sizes = [1, 128], strides = [1, 1]} : vector<8x128xf32> to vector<1x128xf32>
    %7 = vector.broadcast %6 : vector<1x128xf32> to vector<8x128xf32>
    %8 = arith.addf %5, %7 : vector<8x128xf32>
    %cst_6 = arith.constant 0.000000e+00 : f32
    %9 = vector.broadcast %cst_6 : f32 to vector<8x128xf32>
    %10 = arith.maximumf %8, %9 : vector<8x128xf32>
    %cst_7 = arith.constant dense<0.000000e+00> : vector<8x128xf32>
    %11 = tpu.matmul %10, %2, %cst_7 {dimension_numbers = #tpu.dot_dimension_numbers<[1], [0], [0], [1], [0, 0, 1, 1], [], []>} : vector<8x128xf32>, vector<128x128xf32>, vector<8x128xf32> -> vector<8x128xf32>
    %12 = vector.extract_strided_slice %4 {offsets = [1, 0], sizes = [1, 128], strides = [1, 1]} : vector<8x128xf32> to vector<1x128xf32>
    %13 = vector.broadcast %12 : vector<1x128xf32> to vector<8x128xf32>
    %14 = arith.addf %11, %13 : vector<8x128xf32>
    %cst_8 = arith.constant 0.000000e+00 : f32
    %15 = vector.broadcast %cst_8 : f32 to vector<8x128xf32>
    %16 = arith.maximumf %14, %15 : vector<8x128xf32>
    %cst_9 = arith.constant dense<0.000000e+00> : vector<8x128xf32>
    %17 = tpu.matmul %16, %3, %cst_9 {dimension_numbers = #tpu.dot_dimension_numbers<[1], [0], [0], [1], [0, 0, 1, 1], [], []>} : vector<8x128xf32>, vector<128x128xf32>, vector<8x128xf32> -> vector<8x128xf32>
    %18 = vector.extract_strided_slice %4 {offsets = [2, 0], sizes = [1, 128], strides = [1, 1]} : vector<8x128xf32> to vector<1x128xf32>
    %19 = vector.broadcast %18 : vector<1x128xf32> to vector<8x128xf32>
    %20 = arith.addf %17, %19 : vector<8x128xf32>
    %21 = vector.extract_strided_slice %20 {offsets = [0, 0], sizes = [8, 8], strides = [1, 1]} : vector<8x128xf32> to vector<8x8xf32>
    %c0_10 = arith.constant 0 : index
    %c0_11 = arith.constant 0 : index
    %22 = vector.load %arg3[%c0_10, %c0_11] : memref<8x8xf32, #tpu.memory_space<vmem>>, vector<8x8xf32>
    tpu.vector_store %arg3[%c0_10, %c0_11], %21 {strides = array<i32>} : memref<8x8xf32, #tpu.memory_space<vmem>>, vector<8x8xf32>,
    return
  }
  func.func @transform_0(%arg0: i32) -> (i32, i32) {
    %c0_i32 = arith.constant 0 : i32
    %c0_i32_0 = arith.constant 0 : i32
    return %arg0, %c0_i32 : i32, i32
  }
  func.func @transform_1(%arg0: i32) -> (i32, i32) {
    %c0_i32 = arith.constant 0 : i32
    %c0_i32_0 = arith.constant 0 : i32
    %c0_i32_1 = arith.constant 0 : i32
    return %c0_i32, %c0_i32_0 : i32, i32
  }
  func.func @transform_2(%arg0: i32) -> (i32, i32) {
    %c0_i32 = arith.constant 0 : i32
    %c0_i32_0 = arith.constant 0 : i32
    return %arg0, %c0_i32 : i32, i32
  }
}

</mosaic_0001>

<llo_original>
// kernel: net_forward.1
$region0: #{net_forward.1}
  #allocation0 [shape = 'u32[]', space=smem, size = 0x4, offset = 0x4, fixed_abs, tag = 'smem constant byte address 0x4 - core index']
  #allocation1 [shape = 'u32[144,128]{1,0:T(1,128)}', space=vmem, size = 0x12000, scoped, tag = 'internal scratch']
  %s0 = inlined_call_operand.vmem [shape: f32[8,32], index: 0, kind: input, shape index: {}]
  %s1 = inlined_call_operand.hbm [shape: f32[392,128], index: 1, kind: input, shape index: {}]
  %s2 = inlined_call_operand.vmem [shape: f32[8,8], index: 2, kind: output, shape index: {}]
  %s3 = sld [smem:[#allocation0]]
  $region22: #{net_forward.1} parent=0
    _
  %s5 = ssub.s32 1, %s3
  %s6 = scalar_select 0, %s5, %s3
  $region1: #{net_forward.1} parent=0
    #allocation2 [shape = 'u8[200704]{0}', space=vmem, size = 0x31000, scoped, tag = 'input window, operand 1, single buffered']
    #allocation3 [shape = 's32[1]{0}', space=sflag, size = 0x4, scoped, tag = 'scoped memory for net_forward.1']
    %7 = vsyncpa [#allocation3], 0
    // Predicated region
    $region2: #{net_forward.1} parent=1 // pred_check
      _
    $region3: #{net_forward.1} parent=1 // pred_check_branch
      %9 = sbr.rel (0) target = $region5
    $region4: #{net_forward.1} parent=1 // pred_region
      _
    $region5: #{net_forward.1} parent=1 // pred_fallthru
      _
    // Predicated region
    $region6: #{net_forward.1} parent=1 // pred_check
      _
    $region7: #{net_forward.1} parent=1 // pred_check_branch
      %11 = sbr.rel (0) target = $region9
    $region8: #{net_forward.1} parent=1 // pred_region
      %s13 = ssub.s32 6272, 6272
      %14 = vsyncadd [#allocation3], %s13
      %s15 = sshll.u32 [#allocation2], 4
      %s16 = int_to_ptr.vmem [resolvable:$true] %s15
      %21 = dma.hbm_to_vmem [thread:$0]  %s1, 6272, %s16, [#allocation3], 128, 128, 8
    $region9: #{net_forward.1} parent=1 // pred_fallthru
      _
    // Predicated region
    $region10: #{net_forward.1} parent=1 // pred_check
      _
    $region11: #{net_forward.1} parent=1 // pred_check_branch
      %23 = sbr.rel (0) target = $region13
    $region12: #{net_forward.1} parent=1 // pred_region
      %24 = dma.done [#allocation3], 6272
    $region13: #{net_forward.1} parent=1 // pred_fallthru
      _
    %v25 = vld [vmem:[%s0] sm:$0xff]
    %v26 = vld [vmem:[#allocation2] sm:$0xff]
    %v27 = vld [vmem:[#allocation2 + $0x8] sm:$0xff]
    %v28 = vld [vmem:[#allocation2 + $0x10] sm:$0xff]
    %v29 = vld [vmem:[#allocation2 + $0x18] sm:$0xff]
    %v30 = vld [vmem:[#allocation2 + $0x80] sm:$0xff]
    %v31 = vld [vmem:[#allocation2 + $0x88] sm:$0xff]
    %v32 = vld [vmem:[#allocation2 + $0x90] sm:$0xff]
    %v33 = vld [vmem:[#allocation2 + $0x98] sm:$0xff]
    %v34 = vld [vmem:[#allocation2 + $0xa0] sm:$0xff]
    %v35 = vld [vmem:[#allocation2 + $0xa8] sm:$0xff]
    %v36 = vld [vmem:[#allocation2 + $0xb0] sm:$0xff]
    %v37 = vld [vmem:[#allocation2 + $0xb8] sm:$0xff]
    %v38 = vld [vmem:[#allocation2 + $0xc0] sm:$0xff]
    %v39 = vld [vmem:[#allocation2 + $0xc8] sm:$0xff]
    %v40 = vld [vmem:[#allocation2 + $0xd0] sm:$0xff]
    %v41 = vld [vmem:[#allocation2 + $0xd8] sm:$0xff]
    %v42 = vld [vmem:[#allocation2 + $0xe0] sm:$0xff]
    %v43 = vld [vmem:[#allocation2 + $0xe8] sm:$0xff]
    %v44 = vld [vmem:[#allocation2 + $0xf0] sm:$0xff]
    %v45 = vld [vmem:[#allocation2 + $0xf8] sm:$0xff]
    %v46 = vld [vmem:[#allocation2 + $0x100] sm:$0xff]
    %v47 = vld [vmem:[#allocation2 + $0x108] sm:$0xff]
    %v48 = vld [vmem:[#allocation2 + $0x110] sm:$0xff]
    %v49 = vld [vmem:[#allocation2 + $0x118] sm:$0xff]
    %v50 = vld [vmem:[#allocation2 + $0x120] sm:$0xff]
    %v51 = vld [vmem:[#allocation2 + $0x128] sm:$0xff]
    %v52 = vld [vmem:[#allocation2 + $0x130] sm:$0xff]
    %v53 = vld [vmem:[#allocation2 + $0x138] sm:$0xff]
    %v54 = vld [vmem:[#allocation2 + $0x140] sm:$0xff]
    %v55 = vld [vmem:[#allocation2 + $0x148] sm:$0xff]
    %v56 = vld [vmem:[#allocation2 + $0x150] sm:$0xff]
    %v57 = vld [vmem:[#allocation2 + $0x158] sm:$0xff]
    %v58 = vld [vmem:[#allocation2 + $0x160] sm:$0xff]
    %v59 = vld [vmem:[#allocation2 + $0x168] sm:$0xff]
    %v60 = vld [vmem:[#allocation2 + $0x170] sm:$0xff]
    %v61 = vld [vmem:[#allocation2 + $0x178] sm:$0xff]
    %v62 = vld [vmem:[#allocation2 + $0x180] sm:$0xff]
    %v63 = vlaneseq
    %v64 = vshrl.u32 %v63, 7
    %v65 = vsub.s32 0, %v64
    %v66 = vrot.slane %v62, %v65
    %vm67 = vcmask 261120
    %v69 = vsel %vm67, %v25, 0
    %71 = vmatprep.subr.mxu0 0.0
    %72 = vmatpush1.msra.mxu0 0.0
    %73 = vmatprep.subr.mxu0 0.0
    %74 = vmatpush1.msra.mxu0 0.0
    %75 = vmatprep.subr.mxu0 0.0
    %76 = vmatpush1.msra.mxu0 0.0
    %77 = vmatprep.subr.mxu0 0.0
    %78 = vmatpush1.msra.mxu0 0.0
    %79 = vmatprep.subr.mxu0 0.0
    %80 = vmatpush1.msra.mxu0 0.0
    %81 = vmatprep.subr.mxu0 0.0
    %82 = vmatpush1.msra.mxu0 0.0
    %83 = vmatprep.subr.mxu0 0.0
    %84 = vmatpush1.msra.mxu0 0.0
    %85 = vmatprep.subr.mxu0 0.0
    %86 = vmatpush1.msra.mxu0 0.0
    %87 = vmatprep.subr.mxu0 0.0
    %88 = vmatpush1.msra.mxu0 0.0
    %89 = vmatprep.subr.mxu0 0.0
    %90 = vmatpush1.msra.mxu0 0.0
    %91 = vmatprep.subr.mxu0 0.0
    %92 = vmatpush1.msra.mxu0 0.0
    %93 = vmatprep.subr.mxu0 0.0
    %94 = vmatpush1.msra.mxu0 0.0
    %95 = vmatprep.subr.mxu0 0.0
    %96 = vmatpush1.msra.mxu0 %v29
    %97 = vmatprep.subr.mxu0 0.0
    %98 = vmatpush1.msra.mxu0 %v28
    %99 = vmatprep.subr.mxu0 0.0
    %100 = vmatpush1.msra.mxu0 %v27
    %101 = vmatprep.subr.mxu0 0.0
    %102 = vmatpush1.msra.mxu0 %v26
    %103 = vmatprep.subr.mxu0 0.0
    %104 = vmatpush2.msra.mxu0 0.0
    %105 = vmatprep.subr.mxu0 0.0
    %106 = vmatpush2.msra.mxu0 0.0
    %107 = vmatprep.subr.mxu0 0.0
    %108 = vmatpush2.msra.mxu0 0.0
    %109 = vmatprep.subr.mxu0 0.0
    %110 = vmatpush2.msra.mxu0 0.0
    %111 = vmatprep.subr.mxu0 0.0
    %112 = vmatpush2.msra.mxu0 0.0
    %113 = vmatprep.subr.mxu0 0.0
    %114 = vmatpush2.msra.mxu0 0.0
    %115 = vmatprep.subr.mxu0 0.0
    %116 = vmatpush2.msra.mxu0 0.0
    %117 = vmatprep.subr.mxu0 0.0
    %118 = vmatpush2.msra.mxu0 0.0
    %119 = vmatprep.subr.mxu0 0.0
    %120 = vmatpush2.msra.mxu0 0.0
    %121 = vmatprep.subr.mxu0 0.0
    %122 = vmatpush2.msra.mxu0 0.0
    %123 = vmatprep.subr.mxu0 0.0
    %124 = vmatpush2.msra.mxu0 0.0
    %125 = vmatprep.subr.mxu0 0.0
    %126 = vmatpush2.msra.mxu0 0.0
    %127 = vmatprep.subr.mxu0 0.0
    %128 = vmatpush2.msra.mxu0 0.0
    %129 = vmatprep.subr.mxu0 0.0
    %130 = vmatpush2.msra.mxu0 0.0
    %131 = vmatprep.subr.mxu0 0.0
    %132 = vmatpush2.msra.mxu0 0.0
    %133 = vmatprep.subr.mxu0 0.0
    %134 = vmatpush2.msra.mxu0 0.0
    %135 = vmatprep.mubr.f32.mxu0 0.0
    %136 = vmatmul.mubr.f32.gmra.mxu0 %v69
    %v137 = vpop.f32.mrf.mxu0
    %v138 = vadd.f32 %v66, %v137
    %v139 = vpop.f32.mrf.mxu0
    %140 = vdwg.mxu0
    %v141 = vmax.f32 %v138, 0.0
    %v142 = vlaneseq
    %v143 = vshrl.u32 %v142, 7
    %v144 = vsub.s32 1, %v143
    %v145 = vrot.slane %v62, %v144
    %146 = vmatprep.subr.mxu0 0.0
    %147 = vmatpush1.msra.mxu0 %v45
    %148 = vmatprep.subr.mxu0 0.0
    %149 = vmatpush1.msra.mxu0 %v44
    %150 = vmatprep.subr.mxu0 0.0
    %151 = vmatpush1.msra.mxu0 %v43
    %152 = vmatprep.subr.mxu0 0.0
    %153 = vmatpush1.msra.mxu0 %v42
    %154 = vmatprep.subr.mxu0 0.0
    %155 = vmatpush1.msra.mxu0 %v41
    %156 = vmatprep.subr.mxu0 0.0
    %157 = vmatpush1.msra.mxu0 %v40
    %158 = vmatprep.subr.mxu0 0.0
    %159 = vmatpush1.msra.mxu0 %v39
    %160 = vmatprep.subr.mxu0 0.0
    %161 = vmatpush1.msra.mxu0 %v38
    %162 = vmatprep.subr.mxu0 0.0
    %163 = vmatpush1.msra.mxu0 %v37
    %164 = vmatprep.subr.mxu0 0.0
    %165 = vmatpush1.msra.mxu0 %v36
    %166 = vmatprep.subr.mxu0 0.0
    %167 = vmatpush1.msra.mxu0 %v35
    %168 = vmatprep.subr.mxu0 0.0
    %169 = vmatpush1.msra.mxu0 %v34
    %170 = vmatprep.subr.mxu0 0.0
    %171 = vmatpush1.msra.mxu0 %v33
    %172 = vmatprep.subr.mxu0 0.0
    %173 = vmatpush1.msra.mxu0 %v32
    %174 = vmatprep.subr.mxu0 0.0
    %175 = vmatpush1.msra.mxu0 %v31
    %176 = vmatprep.subr.mxu0 0.0
    %177 = vmatpush1.msra.mxu0 %v30
    %178 = vmatprep.subr.mxu0 0.0
    %179 = vmatpush2.msra.mxu0 0.0
    %180 = vmatprep.subr.mxu0 0.0
    %181 = vmatpush2.msra.mxu0 0.0
    %182 = vmatprep.subr.mxu0 0.0
    %183 = vmatpush2.msra.mxu0 0.0
    %184 = vmatprep.subr.mxu0 0.0
    %185 = vmatpush2.msra.mxu0 0.0
    %186 = vmatprep.subr.mxu0 0.0
    %187 = vmatpush2.msra.mxu0 0.0
    %188 = vmatprep.subr.mxu0 0.0
    %189 = vmatpush2.msra.mxu0 0.0
    %190 = vmatprep.subr.mxu0 0.0
    %191 = vmatpush2.msra.mxu0 0.0
    %192 = vmatprep.subr.mxu0 0.0
    %193 = vmatpush2.msra.mxu0 0.0
    %194 = vmatprep.subr.mxu0 0.0
    %195 = vmatpush2.msra.mxu0 0.0
    %196 = vmatprep.subr.mxu0 0.0
    %197 = vmatpush2.msra.mxu0 0.0
    %198 = vmatprep.subr.mxu0 0.0
    %199 = vmatpush2.msra.mxu0 0.0
    %200 = vmatprep.subr.mxu0 0.0
    %201 = vmatpush2.msra.mxu0 0.0
    %202 = vmatprep.subr.mxu0 0.0
    %203 = vmatpush2.msra.mxu0 0.0
    %204 = vmatprep.subr.mxu0 0.0
    %205 = vmatpush2.msra.mxu0 0.0
    %206 = vmatprep.subr.mxu0 0.0
    %207 = vmatpush2.msra.mxu0 0.0
    %208 = vmatprep.subr.mxu0 0.0
    %209 = vmatpush2.msra.mxu0 0.0
    %210 = vmatprep.mubr.f32.mxu0 0.0
    %211 = vmatmul.mubr.f32.gmra.mxu0 %v141
    %v212 = vpop.f32.mrf.mxu0
    %v213 = vadd.f32 %v145, %v212
    %v214 = vpop.f32.mrf.mxu0
    %215 = vdwg.mxu0
    %v216 = vmax.f32 %v213, 0.0
    %v217 = vlaneseq
    %v218 = vshrl.u32 %v217, 7
    %v219 = vsub.s32 2, %v218
    %v220 = vrot.slane %v62, %v219
    %221 = vmatprep.subr.mxu0 0.0
    %222 = vmatpush1.msra.mxu0 %v61
    %223 = vmatprep.subr.mxu0 0.0
    %224 = vmatpush1.msra.mxu0 %v60
    %225 = vmatprep.subr.mxu0 0.0
    %226 = vmatpush1.msra.mxu0 %v59
    %227 = vmatprep.subr.mxu0 0.0
    %228 = vmatpush1.msra.mxu0 %v58
    %229 = vmatprep.subr.mxu0 0.0
    %230 = vmatpush1.msra.mxu0 %v57
    %231 = vmatprep.subr.mxu0 0.0
    %232 = vmatpush1.msra.mxu0 %v56
    %233 = vmatprep.subr.mxu0 0.0
    %234 = vmatpush1.msra.mxu0 %v55
    %235 = vmatprep.subr.mxu0 0.0
    %236 = vmatpush1.msra.mxu0 %v54
    %237 = vmatprep.subr.mxu0 0.0
    %238 = vmatpush1.msra.mxu0 %v53
    %239 = vmatprep.subr.mxu0 0.0
    %240 = vmatpush1.msra.mxu0 %v52
    %241 = vmatprep.subr.mxu0 0.0
    %242 = vmatpush1.msra.mxu0 %v51
    %243 = vmatprep.subr.mxu0 0.0
    %244 = vmatpush1.msra.mxu0 %v50
    %245 = vmatprep.subr.mxu0 0.0
    %246 = vmatpush1.msra.mxu0 %v49
    %247 = vmatprep.subr.mxu0 0.0
    %248 = vmatpush1.msra.mxu0 %v48
    %249 = vmatprep.subr.mxu0 0.0
    %250 = vmatpush1.msra.mxu0 %v47
    %251 = vmatprep.subr.mxu0 0.0
    %252 = vmatpush1.msra.mxu0 %v46
    %253 = vmatprep.subr.mxu0 0.0
    %254 = vmatpush2.msra.mxu0 0.0
    %255 = vmatprep.subr.mxu0 0.0
    %256 = vmatpush2.msra.mxu0 0.0
    %257 = vmatprep.subr.mxu0 0.0
    %258 = vmatpush2.msra.mxu0 0.0
    %259 = vmatprep.subr.mxu0 0.0
    %260 = vmatpush2.msra.mxu0 0.0
    %261 = vmatprep.subr.mxu0 0.0
    %262 = vmatpush2.msra.mxu0 0.0
    %263 = vmatprep.subr.mxu0 0.0
    %264 = vmatpush2.msra.mxu0 0.0
    %265 = vmatprep.subr.mxu0 0.0
    %266 = vmatpush2.msra.mxu0 0.0
    %267 = vmatprep.subr.mxu0 0.0
    %268 = vmatpush2.msra.mxu0 0.0
    %269 = vmatprep.subr.mxu0 0.0
    %270 = vmatpush2.msra.mxu0 0.0
    %271 = vmatprep.subr.mxu0 0.0
    %272 = vmatpush2.msra.mxu0 0.0
    %273 = vmatprep.subr.mxu0 0.0
    %274 = vmatpush2.msra.mxu0 0.0
    %275 = vmatprep.subr.mxu0 0.0
    %276 = vmatpush2.msra.mxu0 0.0
    %277 = vmatprep.subr.mxu0 0.0
    %278 = vmatpush2.msra.mxu0 0.0
    %279 = vmatprep.subr.mxu0 0.0
    %280 = vmatpush2.msra.mxu0 0.0
    %281 = vmatprep.subr.mxu0 0.0
    %282 = vmatpush2.msra.mxu0 0.0
    %283 = vmatprep.subr.mxu0 0.0
    %284 = vmatpush2.msra.mxu0 0.0
    %285 = vmatprep.mubr.f32.mxu0 0.0
    %286 = vmatmul.mubr.f32.gmra.mxu0 %v216
    %v287 = vpop.f32.mrf.mxu0
    %v288 = vadd.f32 %v220, %v287
    %v289 = vpop.f32.mrf.mxu0
    %290 = vdwg.mxu0
    %vm291 = vcmask 64512
    %292 = vst.msk [vmem:[%s2] sm:$0xff] %vm291, %v288
    // Predicated region
    $region14: #{net_forward.1} parent=1 // pred_check
      _
    $region15: #{net_forward.1} parent=1 // pred_check_branch
      %294 = sbr.rel (0) target = $region17
    $region16: #{net_forward.1} parent=1 // pred_region
      _
    $region17: #{net_forward.1} parent=1 // pred_fallthru
      _
    // Predicated region
    $region18: #{net_forward.1} parent=1 // pred_check
      _
    $region19: #{net_forward.1} parent=1 // pred_check_branch
      %296 = sbr.rel (0) target = $region21
    $region20: #{net_forward.1} parent=1 // pred_region
      _
    $region21: #{net_forward.1} parent=1 // pred_fallthru
      _
    %297 = vsyncpa [#allocation3], 1

</llo_original>
